<compile_context>
chip_gen: v7x
topology: tpu7x:2x2x1
jax: 0.10.0
libtpu: 0.0.40
codegen_flags: <defaults>
</compile_context>

<pallas_src>
import jax
import jax.numpy as jnp
from jax.experimental import pallas as pl
from jax.experimental.pallas import tpu as pltpu

_LANE = 128
_SUBLANE = 8
_VMEM_BUDGET = 24 << 20   # conservative tile-selection budget; fits every gen's scoped VMEM


def _round_up(x, m):
    return ((x + m - 1) // m) * m


def _proj_embedding_kernel(x_ref, w_ref, b_ref, out_ref):
    # One affine projection per (row, lane) tile: (tm, F) @ (F, tn) + (1, tn).
    acc = jnp.dot(x_ref[...], w_ref[...], preferred_element_type=jnp.float32)
    out_ref[...] = (acc + b_ref[...]).astype(out_ref.dtype)


def _choose_tiles(M, F, E, tm_req):
    """Pick (tm, tn, vmem_limit_bytes) for the (M,F)x(F,E) projection."""
    itemsize = 4  # f32

    # --- E (lane) tiling: keep W/b fully resident unless that blows the budget
    #     (v7x has only 64 MiB VMEM per TC); otherwise stream lane-dense chunks.
    wb_full = 2 * itemsize * (F * E + E)          # double-buffer-conservative accounting
    if wb_full <= _VMEM_BUDGET // 2 or E < 2 * _LANE:
        tn = E                                    # weight fully resident, single E tile
        wb_bytes = wb_full
    else:
        tn = min(E, 4 * _LANE)                    # stream W in multiple-of-128 chunks
        wb_bytes = 2 * itemsize * (F * tn + tn)
    # TODO(synk): an F so large that even one (F, 128) weight column exceeds VMEM
    # would need F-blocking with an f32 accumulator scratch; not implemented.

    # --- M (row) tiling from the remaining budget: double-buffered x / out tiles.
    per_row = 2 * itemsize * (F + tn)
    avail = max(_VMEM_BUDGET - wb_bytes, per_row * _SUBLANE)
    tm_cap = max(_SUBLANE, (avail // per_row) // _SUBLANE * _SUBLANE)
    tm = min(_round_up(max(tm_req, _SUBLANE), _SUBLANE), tm_cap)

    # --- give the second TensorCore (v7x megacore) work once M is non-trivial.
    if M >= 512:
        tm = min(tm, _round_up(pl.cdiv(M, 2), _SUBLANE))
    # --- a full-extent row block is always layout-legal; never exceed M.
    if tm >= M:
        tm = M

    footprint = 2 * itemsize * tm * (F + tn) + wb_bytes
    vmem_limit = min(max(footprint + (4 << 20), 16 << 20), 48 << 20)
    return tm, tn, vmem_limit


def init_proj_embedding_params(key, input_size, embedding_size=128):
    """nn.Linear-style init: U[-1/sqrt(fan_in), 1/sqrt(fan_in)].
    Weight stored transposed vs. PyTorch, i.e. (in_features, out_features)."""
    kw, kb = jax.random.split(key)
    bound = 1.0 / float(input_size) ** 0.5
    w = jax.random.uniform(kw, (input_size, embedding_size), jnp.float32, -bound, bound)
    b = jax.random.uniform(kb, (1, embedding_size), jnp.float32, -bound, bound)
    return {"w": w, "b": b}


def proj_embedding_forward(x, params, tm=2048):
    """x: (B, S, F) float32  ->  (B, S, E) float32."""
    assert x.ndim == 3 and x.dtype == jnp.float32, (
        f"ProjEmbedding input must be 3-D float32, got {x.shape} {x.dtype}")
    B, S, F = x.shape
    w, b = params["w"], params["b"]
    E = w.shape[1]
    M = B * S

    x2 = x.reshape(M, F)

    tm, tn, vmem_limit = _choose_tiles(M, F, E, tm)
    n_m = pl.cdiv(M, tm)
    n_e = pl.cdiv(E, tn)

    cost = pl.CostEstimate(
        flops=2 * M * F * E,
        transcendentals=0,
        bytes_accessed=4 * (M * F + F * E + E + M * E),
    )

    out2 = pl.pallas_call(
        _proj_embedding_kernel,
        out_shape=jax.ShapeDtypeStruct((M, E), jnp.float32),
        grid_spec=pl.GridSpec(
            # E tiles outer (weight tile stays put across the inner row sweep),
            # row tiles inner.  For small E this is a trivial (1, n_m) grid.
            grid=(n_e, n_m),
            in_specs=[
                pl.BlockSpec((tm, F), lambda j, i: (i, 0)),   # activations, row-tiled
                pl.BlockSpec((F, tn), lambda j, i: (0, j)),   # weight (resident or streamed)
                pl.BlockSpec((1, tn), lambda j, i: (0, j)),   # bias
            ],
            out_specs=pl.BlockSpec((tm, tn), lambda j, i: (i, j)),
        ),
        compiler_params=pltpu.CompilerParams(
            dimension_semantics=("parallel", "parallel"),
            vmem_limit_bytes=vmem_limit,
        ),
        cost_estimate=cost,
    )(x2, w, b)

    return out2.reshape(B, S, E)


def _reference(x, params):
    return x @ params["w"] + params["b"]


if __name__ == "__main__":
    key = jax.random.PRNGKey(0)
    kp, kx, kx2, kx3 = jax.random.split(key, 4)

    input_size, embedding_size = 32, 128
    params = init_proj_embedding_params(kp, input_size, embedding_size)

    # Small shape consistent with ProjEmbedding's 3-D (B, S, input_size) input.
    B, S = 2, 8
    x = jax.random.normal(kx, (B, S, input_size), jnp.float32)
    out = jax.block_until_ready(proj_embedding_forward(x, params))
    ref = _reference(x, params)
    assert out.shape == (B, S, embedding_size)
    assert jnp.allclose(out, ref, atol=1e-5, rtol=1e-5), "mismatch vs reference"

    # Row count not a multiple of 8 -> single full-extent block (no padding copy).
    x2 = jax.random.normal(kx2, (3, 5, input_size), jnp.float32)
    out2 = jax.block_until_ready(proj_embedding_forward(x2, params))
    assert out2.shape == (3, 5, embedding_size)
    assert jnp.allclose(out2, _reference(x2, params), atol=1e-5, rtol=1e-5), \
        "mismatch vs reference (small ragged)"

    # Mid-size case: multi-step row grid with a masked ragged tail block.
    x3 = jax.random.normal(kx3, (4, 625, input_size), jnp.float32)
    out3 = jax.block_until_ready(proj_embedding_forward(x3, params))
    assert out3.shape == (4, 625, embedding_size)
    assert jnp.allclose(out3, _reference(x3, params), atol=1e-5, rtol=1e-5), \
        "mismatch vs reference (multi-block ragged)"

    print("KERNEL_OK")
</pallas_src>

<mosaic_0001>
module attributes {stable_mosaic.version = 11 : i64} {
  func.func @_proj_embedding_kernel(%arg0: i32, %arg1: i32, %arg2: memref<16x32xf32, #tpu.memory_space<vmem>>, %arg3: memref<32x128xf32, #tpu.memory_space<vmem>>, %arg4: memref<1x128xf32, #tpu.memory_space<vmem>>, %arg5: memref<16x128xf32, #tpu.memory_space<vmem>>) attributes {dimension_semantics = [#tpu.dimension_semantics<parallel>, #tpu.dimension_semantics<parallel>], iteration_bounds = array<i64: 1, 1>, scalar_prefetch = 0 : i64, scratch_operands = 0 : i64, tpu.core_type = #tpu.core_type<tc>, window_params = [{transform_indices = @transform_0, window_bounds = array<i64: 16, 32>}, {transform_indices = @transform_1, window_bounds = array<i64: 32, 128>}, {transform_indices = @transform_2, window_bounds = array<i64: 1, 128>}, {transform_indices = @transform_3, window_bounds = array<i64: 16, 128>}]} {
    %c0 = arith.constant 0 : index
    %c0_0 = arith.constant 0 : index
    %0 = vector.load %arg2[%c0, %c0_0] : memref<16x32xf32, #tpu.memory_space<vmem>>, vector<16x32xf32>
    %c0_1 = arith.constant 0 : index
    %c0_2 = arith.constant 0 : index
    %1 = vector.load %arg3[%c0_1, %c0_2] : memref<32x128xf32, #tpu.memory_space<vmem>>, vector<32x128xf32>
    %cst = arith.constant dense<0.000000e+00> : vector<16x128xf32>
    %2 = tpu.matmul %0, %1, %cst {dimension_numbers = #tpu.dot_dimension_numbers<[1], [0], [0], [1], [0, 0, 1, 1], [], []>} : vector<16x32xf32>, vector<32x128xf32>, vector<16x128xf32> -> vector<16x128xf32>
    %c0_3 = arith.constant 0 : index
    %c0_4 = arith.constant 0 : index
    %3 = vector.load %arg4[%c0_3, %c0_4] : memref<1x128xf32, #tpu.memory_space<vmem>>, vector<1x128xf32>
    %4 = vector.broadcast %3 : vector<1x128xf32> to vector<16x128xf32>
    %5 = arith.addf %2, %4 : vector<16x128xf32>
    %c0_5 = arith.constant 0 : index
    %c0_6 = arith.constant 0 : index
    %6 = vector.load %arg5[%c0_5, %c0_6] : memref<16x128xf32, #tpu.memory_space<vmem>>, vector<16x128xf32>
    tpu.vector_store %arg5[%c0_5, %c0_6], %5 {strides = array<i32>} : memref<16x128xf32, #tpu.memory_space<vmem>>, vector<16x128xf32>,
    return
  }
  func.func @transform_0(%arg0: i32, %arg1: i32) -> (i32, i32) {
    %c0_i32 = arith.constant 0 : i32
    %c0_i32_0 = arith.constant 0 : i32
    return %arg1, %c0_i32 : i32, i32
  }
  func.func @transform_1(%arg0: i32, %arg1: i32) -> (i32, i32) {
    %c0_i32 = arith.constant 0 : i32
    %c0_i32_0 = arith.constant 0 : i32
    return %c0_i32, %arg0 : i32, i32
  }
  func.func @transform_2(%arg0: i32, %arg1: i32) -> (i32, i32) {
    %c0_i32 = arith.constant 0 : i32
    %c0_i32_0 = arith.constant 0 : i32
    return %c0_i32, %arg0 : i32, i32
  }
  func.func @transform_3(%arg0: i32, %arg1: i32) -> (i32, i32) {
    %c0_i32 = arith.constant 0 : i32
    return %arg1, %arg0 : i32, i32
  }
}

</mosaic_0001>

<llo_original>
// kernel: tpu_custom_call.1
$region0: #{tpu_custom_call.1}
  #allocation0 [shape = 'u32[]', space=smem, size = 0x4, offset = 0x4, fixed_abs, tag = 'smem constant byte address 0x4 - core index']
  #allocation1 [shape = 'u32[144,128]{1,0:T(1,128)}', space=vmem, size = 0x12000, scoped, tag = 'internal scratch']
  %s0 = inlined_call_operand.hbm [shape: f32[16,32], index: 0, kind: input, shape index: {}]
  %s1 = inlined_call_operand.hbm [shape: f32[32,128], index: 1, kind: input, shape index: {}]
  %s2 = inlined_call_operand.vmem [shape: f32[1,128], index: 2, kind: input, shape index: {}]
  %s3 = inlined_call_operand.hbm [shape: f32[16,128], index: 3, kind: output, shape index: {}]
  %s4 = sld [smem:[#allocation0]]
  $region30: #{tpu_custom_call.1} parent=0
    _
  %s6 = ssub.s32 1, %s4
  %s7 = scalar_select 0, %s6, %s4
  $region1: #{tpu_custom_call.1} parent=0
    #allocation2 [shape = 'u8[8192]{0}', space=vmem, size = 0x2000, scoped, tag = 'input window, operand 0, single buffered']
    #allocation3 [shape = 's32[1]{0}', space=sflag, size = 0x4, scoped, tag = 'scoped memory for tpu_custom_call.1']
    #allocation4 [shape = 's32[1]{0}', space=sflag, size = 0x4, scoped, tag = 'scoped memory for tpu_custom_call.1']
    #allocation5 [shape = 'u8[16384]{0}', space=vmem, size = 0x4000, scoped, tag = 'input window, operand 1, single buffered']
    #allocation6 [shape = 's32[1]{0}', space=sflag, size = 0x4, scoped, tag = 'scoped memory for tpu_custom_call.1']
    #allocation7 [shape = 'u8[8192]{0}', space=vmem, size = 0x2000, scoped, tag = 'output window, operand 0, single buffered']
    %8 = vsyncpa [#allocation3], 0
    %9 = vsyncpa [#allocation6], 0
    %10 = vsyncpa [#allocation4], 0
    // Predicated region
    $region2: #{tpu_custom_call.1} parent=1 // pred_check
      _
    $region3: #{tpu_custom_call.1} parent=1 // pred_check_branch
      %12 = sbr.rel (0) target = $region5
    $region4: #{tpu_custom_call.1} parent=1 // pred_region
      %s14 = ssub.s32 256, 256
      %15 = vsyncadd [#allocation3], %s14
      %s16 = sshll.u32 [#allocation2], 4
      %s17 = int_to_ptr.vmem [resolvable:$true] %s16
      %22 = dma.hbm_to_vmem [thread:$0]  %s0, 256, %s17, [#allocation3], 128, 128, 8
    $region5: #{tpu_custom_call.1} parent=1 // pred_fallthru
      _
    // Predicated region
    $region6: #{tpu_custom_call.1} parent=1 // pred_check
      _
    $region7: #{tpu_custom_call.1} parent=1 // pred_check_branch
      %24 = sbr.rel (0) target = $region9
    $region8: #{tpu_custom_call.1} parent=1 // pred_region
      %s26 = ssub.s32 512, 512
      %27 = vsyncadd [#allocation6], %s26
      %s28 = sshll.u32 [#allocation5], 4
      %s29 = int_to_ptr.vmem [resolvable:$true] %s28
      %34 = dma.hbm_to_vmem [thread:$0]  %s1, 512, %s29, [#allocation6], 128, 128, 8
    $region9: #{tpu_custom_call.1} parent=1 // pred_fallthru
      _
    // Predicated region
    $region10: #{tpu_custom_call.1} parent=1 // pred_check
      _
    $region11: #{tpu_custom_call.1} parent=1 // pred_check_branch
      %36 = sbr.rel (0) target = $region13
    $region12: #{tpu_custom_call.1} parent=1 // pred_region
      _
    $region13: #{tpu_custom_call.1} parent=1 // pred_fallthru
      _
    // Predicated region
    $region14: #{tpu_custom_call.1} parent=1 // pred_check
      _
    $region15: #{tpu_custom_call.1} parent=1 // pred_check_branch
      %38 = sbr.rel (0) target = $region17
    $region16: #{tpu_custom_call.1} parent=1 // pred_region
      %39 = dma.done [#allocation3], 256
    $region17: #{tpu_custom_call.1} parent=1 // pred_fallthru
      _
    // Predicated region
    $region18: #{tpu_custom_call.1} parent=1 // pred_check
      _
    $region19: #{tpu_custom_call.1} parent=1 // pred_check_branch
      %41 = sbr.rel (0) target = $region21
    $region20: #{tpu_custom_call.1} parent=1 // pred_region
      %42 = dma.done [#allocation6], 512
    $region21: #{tpu_custom_call.1} parent=1 // pred_fallthru
      _
    %v43 = vld [vmem:[#allocation2] sm:$0xff]
    %v44 = vld [vmem:[#allocation2 + $0x8] sm:$0xff]
    %v45 = vld [vmem:[#allocation5] sm:$0xff]
    %v46 = vld [vmem:[#allocation5 + $0x8] sm:$0xff]
    %v47 = vld [vmem:[#allocation5 + $0x10] sm:$0xff]
    %v48 = vld [vmem:[#allocation5 + $0x18] sm:$0xff]
    %v49 = vld [vmem:[%s2] sm:$0x1]
    %v51 = vlaneseq
    %v52 = vshrl.u32 %v51, 7
    %v53 = vsub.s32 0, %v52
    %v54 = vrot.slane %v49, %v53
    %vm56 = vcmask 261120
    %v58 = vsel %vm56, %v43, 0
    %v61 = vsel %vm56, %v44, 0
    %63 = vmatprep.subr.mxu0 0.0
    %64 = vmatpush1.msra.mxu0 %v45
    %65 = vmatprep.subr.mxu0 0.0
    %66 = vmatpush1.msra.mxu0 %v46
    %67 = vmatprep.subr.mxu0 0.0
    %68 = vmatpush1.msra.mxu0 %v47
    %69 = vmatprep.subr.mxu0 0.0
    %70 = vmatpush1.msra.mxu0 %v48
    %71 = vmatprep.subr.mxu0 0.0
    %72 = vmatpush1.msra.mxu0 0.0
    %73 = vmatprep.subr.mxu0 0.0
    %74 = vmatpush1.msra.mxu0 0.0
    %75 = vmatprep.subr.mxu0 0.0
    %76 = vmatpush1.msra.mxu0 0.0
    %77 = vmatprep.subr.mxu0 0.0
    %78 = vmatpush1.msra.mxu0 0.0
    %79 = vmatprep.subr.mxu0 0.0
    %80 = vmatpush1.msra.mxu0 0.0
    %81 = vmatprep.subr.mxu0 0.0
    %82 = vmatpush1.msra.mxu0 0.0
    %83 = vmatprep.subr.mxu0 0.0
    %84 = vmatpush1.msra.mxu0 0.0
    %85 = vmatprep.subr.mxu0 0.0
    %86 = vmatpush1.msra.mxu0 0.0
    %87 = vmatprep.subr.mxu0 0.0
    %88 = vmatpush1.msra.mxu0 0.0
    %89 = vmatprep.subr.mxu0 0.0
    %90 = vmatpush1.msra.mxu0 0.0
    %91 = vmatprep.subr.mxu0 0.0
    %92 = vmatpush1.msra.mxu0 0.0
    %93 = vmatprep.subr.mxu0 0.0
    %94 = vmatpush1.msra.mxu0 0.0
    %95 = vmatprep.subr.mxu0 0.0
    %96 = vmatpush1.msra.mxu0 0.0
    %97 = vmatprep.subr.mxu0 0.0
    %98 = vmatpush1.msra.mxu0 0.0
    %99 = vmatprep.subr.mxu0 0.0
    %100 = vmatpush1.msra.mxu0 0.0
    %101 = vmatprep.subr.mxu0 0.0
    %102 = vmatpush1.msra.mxu0 0.0
    %103 = vmatprep.subr.mxu0 0.0
    %104 = vmatpush1.msra.mxu0 0.0
    %105 = vmatprep.subr.mxu0 0.0
    %106 = vmatpush1.msra.mxu0 0.0
    %107 = vmatprep.subr.mxu0 0.0
    %108 = vmatpush1.msra.mxu0 0.0
    %109 = vmatprep.subr.mxu0 0.0
    %110 = vmatpush1.msra.mxu0 0.0
    %111 = vmatprep.subr.mxu0 0.0
    %112 = vmatpush1.msra.mxu0 0.0
    %113 = vmatprep.subr.mxu0 0.0
    %114 = vmatpush1.msra.mxu0 0.0
    %115 = vmatprep.subr.mxu0 0.0
    %116 = vmatpush1.msra.mxu0 0.0
    %117 = vmatprep.subr.mxu0 0.0
    %118 = vmatpush1.msra.mxu0 0.0
    %119 = vmatprep.subr.mxu0 0.0
    %120 = vmatpush1.msra.mxu0 0.0
    %121 = vmatprep.subr.mxu0 0.0
    %122 = vmatpush1.msra.mxu0 0.0
    %123 = vmatprep.subr.mxu0 0.0
    %124 = vmatpush1.msra.mxu0 0.0
    %125 = vmatprep.subr.mxu0 0.0
    %126 = vmatpush1.msra.mxu0 0.0
    %127 = vmatprep.mubr.f32.mxu0 0.0
    %128 = vmatmul.mubr.f32.gmra.mrb[0].mxu0 %v58
    %v129 = vpop.f32.mrb[0].mxu0
    %v130 = vadd.f32 %v54, %v129
    %v131 = vpop.f32.mrb[0].mxu0
    %132 = vmatprep.mubr.f32.mxu0 0.0
    %133 = vmatmul.mubr.f32.gmra.mrb[0].mxu0 %v61
    %v134 = vpop.f32.mrb[0].mxu0
    %v135 = vadd.f32 %v54, %v134
    %v136 = vpop.f32.mrb[0].mxu0
    %137 = vdwg.mxu0
    %138 = vst [vmem:[#allocation7] sm:$0xff] %v130
    %139 = vst [vmem:[#allocation7 + $0x8] sm:$0xff] %v135
    // Predicated region
    $region22: #{tpu_custom_call.1} parent=1 // pred_check
      _
    $region23: #{tpu_custom_call.1} parent=1 // pred_check_branch
      %141 = sbr.rel (0) target = $region25
    $region24: #{tpu_custom_call.1} parent=1 // pred_region
      %s143 = ssub.s32 256, 256
      %144 = vsyncadd [#allocation4], %s143
      %s145 = sshll.u32 [#allocation7], 4
      %s146 = int_to_ptr.vmem [resolvable:$true] %s145
      %151 = dma.vmem_to_hbm [thread:$0]  %s146, 256, %s3, [#allocation4], 128, 128, 8
    $region25: #{tpu_custom_call.1} parent=1 // pred_fallthru
      _
    // Predicated region
    $region26: #{tpu_custom_call.1} parent=1 // pred_check
      _
    $region27: #{tpu_custom_call.1} parent=1 // pred_check_branch
      %153 = sbr.rel (0) target = $region29
    $region28: #{tpu_custom_call.1} parent=1 // pred_region
      %154 = dma.done [#allocation4], 256
    $region29: #{tpu_custom_call.1} parent=1 // pred_fallthru
      _
    %155 = vsyncpa [#allocation3], 1
    %156 = vsyncpa [#allocation6], 1
    %157 = vsyncpa [#allocation4], 1

</llo_original>
